<compile_context>
chip_gen: v7x
topology: tpu7x:2x2x1
jax: 0.10.0
libtpu: 0.0.40
codegen_flags: <defaults>
</compile_context>

<pallas_src>
import jax
import jax.numpy as jnp
from jax.experimental import pallas as pl
from jax.experimental.pallas import tpu as pltpu


def _pick_tile(n: int, preferred: int, align: int) -> int:
    """Largest tile <= `preferred` that divides `n` and is `align`-aligned; else full `n`."""
    if n <= preferred:
        return n
    t = (preferred // align) * align
    while t >= align:
        if n % t == 0:
            return t
        t -= align
    # TODO(synk): for huge D that is not a multiple of 128 (e.g. vocab 30522), pad D to a
    # 128-multiple outside the kernel instead of falling back to a full-D block.
    return n


def _splade_pool_kernel(lens_ref, emb_ref, out_ref, acc_ref):
    # lens_ref: (B,) int32 in SMEM (scalar prefetch) - number of valid tokens per sequence
    # emb_ref : (1, TS, TD) VMEM tile of token embeddings
    # out_ref : (1, 1, TD) VMEM tile of the pooled sentence embedding
    # acc_ref : (1, 1, TD) f32 VMEM scratch - running max over the S (reduction) grid axis
    b = pl.program_id(0)
    s_blk = pl.program_id(2)

    @pl.when(s_blk == 0)
    def _init():
        # relu(x) * mask >= 0, so 0 is the correct identity for the running max.
        acc_ref[...] = jnp.zeros_like(acc_ref)

    x = emb_ref[...]                      # (1, TS, TD)
    ts = x.shape[1]

    # Rebuild the padding mask from the valid-token count (VPU work, no extra HBM stream).
    pos = jax.lax.broadcasted_iota(jnp.int32, x.shape, 1) + s_blk * ts
    valid = pos < lens_ref[b]
    masked = jnp.where(valid, jnp.maximum(x, jnp.zeros_like(x)), jnp.zeros_like(x))

    # Partial max over this S tile (max is exact in bf16; accumulate in f32).
    partial = jnp.max(masked, axis=1, keepdims=True).astype(jnp.float32)   # (1, 1, TD)
    acc_ref[...] = jnp.maximum(acc_ref[...], partial)

    @pl.when(s_blk == pl.num_programs(2) - 1)
    def _finalize():
        # Single transcendental per output element, in f32, after the reduction.
        out_ref[...] = jnp.log1p(acc_ref[...]).astype(out_ref.dtype)


def splade_pooling(token_embeddings: jax.Array, attention_mask: jax.Array,
                   *, td: int | None = None, ts: int | None = None) -> jax.Array:
    """token_embeddings: [B, S, D]; attention_mask: [B, S] (0/1) -> [B, D]."""
    B, S, D = token_embeddings.shape
    if td is None:
        # Lane-dense D tiles; 2048 f32 lanes * 512 sublanes = 4 MiB/buffer worst case,
        # comfortably inside the scoped-VMEM defaults on v5e / v6e / v7x (double-buffered).
        td = _pick_tile(D, preferred=2048, align=128)
    if ts is None:
        ts = _pick_tile(S, preferred=512, align=8)
    assert D % td == 0 and S % ts == 0

    # Valid-token counts for scalar prefetch (SMEM). Assumes the standard contiguous
    # right-padded attention mask (1s followed by 0s), as produced by HF tokenizers.
    lens = jnp.sum(attention_mask, axis=1).astype(jnp.int32)

    grid = (B, D // td, S // ts)

    out = pl.pallas_call(
        _splade_pool_kernel,
        out_shape=jax.ShapeDtypeStruct((B, 1, D), token_embeddings.dtype),
        grid_spec=pltpu.PrefetchScalarGridSpec(
            num_scalar_prefetch=1,
            grid=grid,
            in_specs=[
                pl.BlockSpec((1, ts, td), lambda b, d, s, _: (b, s, d)),
            ],
            out_specs=pl.BlockSpec((1, 1, td), lambda b, d, s, _: (b, 0, d)),
            scratch_shapes=[pltpu.VMEM((1, 1, td), jnp.float32)],
        ),
        compiler_params=pltpu.CompilerParams(
            # S is the reduction axis (accumulator resident across it); B and D tiles are
            # independent and can shard across the two v7x TensorCores.
            dimension_semantics=("parallel", "parallel", "arbitrary"),
        ),
    )(lens, token_embeddings)
    return out.reshape(B, D)


def splade_pooling_ref(token_embeddings, attention_mask):
    m = attention_mask.astype(token_embeddings.dtype)[..., None]
    return jnp.max(jnp.log1p(jnp.maximum(token_embeddings, 0.0)) * m, axis=1)


if __name__ == "__main__":
    key = jax.random.PRNGKey(0)
    B, S, D = 4, 16, 256  # word_embedding_dimension = 256 (small demo config)

    k1, k2 = jax.random.split(key)
    token_embeddings = jax.random.normal(k1, (B, S, D), dtype=jnp.float32)
    # attention mask: 1s for valid tokens, trailing 0s (right padding)
    valid_lens = jnp.array([S, 13, 9, 1], dtype=jnp.int32)
    attention_mask = (jnp.arange(S)[None, :] < valid_lens[:, None]).astype(jnp.int32)

    ref = splade_pooling_ref(token_embeddings, attention_mask)

    # Default tiles (single S/D block per sequence).
    out = jax.block_until_ready(splade_pooling(token_embeddings, attention_mask))
    assert out.shape == (B, D)
    assert jnp.allclose(out, ref, atol=1e-6, rtol=1e-6), "mismatch vs reference (default tiles)"

    # Small explicit tiles: exercises the D-tile grid axis and the S running-max accumulator.
    out_tiled = jax.block_until_ready(
        splade_pooling(token_embeddings, attention_mask, td=128, ts=8))
    assert jnp.allclose(out_tiled, ref, atol=1e-6, rtol=1e-6), "mismatch vs reference (tiled)"

    print("KERNEL_OK")
</pallas_src>

<mosaic_0001>
module attributes {stable_mosaic.version = 11 : i64} {
  func.func @_splade_pool_kernel(%arg0: i32, %arg1: i32, %arg2: i32, %arg3: memref<4xi32, #tpu.memory_space<smem>>, %arg4: memref<1x16x256xf32, #tpu.memory_space<vmem>>, %arg5: memref<1x1x256xf32, #tpu.memory_space<vmem>>, %arg6: memref<1x1x256xf32, #tpu.memory_space<vmem>>) attributes {dimension_semantics = [#tpu.dimension_semantics<parallel>, #tpu.dimension_semantics<parallel>, #tpu.dimension_semantics<arbitrary>], iteration_bounds = array<i64: 4, 1, 1>, scalar_prefetch = 1 : i64, scratch_operands = 1 : i64, tpu.core_type = #tpu.core_type<tc>, window_params = [{transform_indices = @transform_0, window_bounds = array<i64: 1, 16, 256>}, {transform_indices = @transform_1, window_bounds = array<i64: 1, 1, 256>}]} {
    %c0_i32 = arith.constant 0 : i32
    %0 = arith.cmpi eq, %arg2, %c0_i32 : i32
    %1 = arith.extui %0 : i1 to i32
    %c0_i32_0 = arith.constant 0 : i32
    %2 = arith.cmpi ne, %1, %c0_i32_0 : i32
    scf.if %2 {
      %cst_13 = arith.constant 0.000000e+00 : f32
      %24 = vector.broadcast %cst_13 : f32 to vector<1x1x256xf32>
      %c0_14 = arith.constant 0 : index
      %c0_15 = arith.constant 0 : index
      %c0_16 = arith.constant 0 : index
      %25 = vector.load %arg6[%c0_14, %c0_15, %c0_16] : memref<1x1x256xf32, #tpu.memory_space<vmem>>, vector<1x1x256xf32>
      tpu.vector_store %arg6[%c0_14, %c0_15, %c0_16], %24 {strides = array<i32>} : memref<1x1x256xf32, #tpu.memory_space<vmem>>, vector<1x1x256xf32>,
    } else {
    }
    %c0 = arith.constant 0 : index
    %c0_1 = arith.constant 0 : index
    %c0_2 = arith.constant 0 : index
    %3 = vector.load %arg4[%c0, %c0_1, %c0_2] : memref<1x16x256xf32, #tpu.memory_space<vmem>>, vector<1x16x256xf32>
    %4 = tpu.iota {dimensions = array<i32: 1>} : vector<1x16x256xi32>
    %c16_i32 = arith.constant 16 : i32
    %5 = arith.muli %arg2, %c16_i32 : i32
    %6 = vector.broadcast %5 : i32 to vector<1x16x256xi32>
    %7 = arith.addi %4, %6 : vector<1x16x256xi32>
    %8 = arith.index_cast %arg0 : i32 to index
    %9 = memref.load %arg3[%8] : memref<4xi32, #tpu.memory_space<smem>>
    %10 = vector.broadcast %9 : i32 to vector<1x16x256xi32>
    %11 = arith.cmpi slt, %7, %10 : vector<1x16x256xi32>
    %cst = arith.constant 0.000000e+00 : f32
    %12 = vector.broadcast %cst : f32 to vector<1x16x256xf32>
    %13 = arith.maximumf %3, %12 : vector<1x16x256xf32>
    %cst_3 = arith.constant 0.000000e+00 : f32
    %14 = vector.broadcast %cst_3 : f32 to vector<1x16x256xf32>
    %15 = arith.select %11, %13, %14 : vector<1x16x256xi1>, vector<1x16x256xf32>
    %cst_4 = arith.constant dense<0xFF800000> : vector<1x256xf32>
    %16 = vector.multi_reduction <maximumf>, %15, %cst_4 [1] : vector<1x16x256xf32> to vector<1x256xf32>
    %17 = vector.shape_cast %16 : vector<1x256xf32> to vector<1x1x256xf32>
    %c0_5 = arith.constant 0 : index
    %c0_6 = arith.constant 0 : index
    %c0_7 = arith.constant 0 : index
    %18 = vector.load %arg6[%c0_5, %c0_6, %c0_7] : memref<1x1x256xf32, #tpu.memory_space<vmem>>, vector<1x1x256xf32>
    %19 = arith.maximumf %18, %17 : vector<1x1x256xf32>
    %c0_8 = arith.constant 0 : index
    %c0_9 = arith.constant 0 : index
    %c0_10 = arith.constant 0 : index
    %20 = vector.load %arg6[%c0_8, %c0_9, %c0_10] : memref<1x1x256xf32, #tpu.memory_space<vmem>>, vector<1x1x256xf32>
    tpu.vector_store %arg6[%c0_8, %c0_9, %c0_10], %19 {strides = array<i32>} : memref<1x1x256xf32, #tpu.memory_space<vmem>>, vector<1x1x256xf32>,
    %c0_i32_11 = arith.constant 0 : i32
    %21 = arith.cmpi eq, %arg2, %c0_i32_11 : i32
    %22 = arith.extui %21 : i1 to i32
    %c0_i32_12 = arith.constant 0 : i32
    %23 = arith.cmpi ne, %22, %c0_i32_12 : i32
    scf.if %23 {
      %c0_13 = arith.constant 0 : index
      %c0_14 = arith.constant 0 : index
      %c0_15 = arith.constant 0 : index
      %24 = vector.load %arg6[%c0_13, %c0_14, %c0_15] : memref<1x1x256xf32, #tpu.memory_space<vmem>>, vector<1x1x256xf32>
      %25 = math.log1p %24 : vector<1x1x256xf32>
      %c0_16 = arith.constant 0 : index
      %c0_17 = arith.constant 0 : index
      %c0_18 = arith.constant 0 : index
      %26 = vector.load %arg5[%c0_16, %c0_17, %c0_18] : memref<1x1x256xf32, #tpu.memory_space<vmem>>, vector<1x1x256xf32>
      tpu.vector_store %arg5[%c0_16, %c0_17, %c0_18], %25 {strides = array<i32>} : memref<1x1x256xf32, #tpu.memory_space<vmem>>, vector<1x1x256xf32>,
    } else {
    }
    return
  }
  func.func @transform_0(%arg0: i32, %arg1: i32, %arg2: i32, %arg3: memref<4xi32, #tpu.memory_space<smem>>) -> (i32, i32, i32) {
    %c0_i32 = arith.constant 0 : i32
    return %arg0, %arg2, %arg1 : i32, i32, i32
  }
  func.func @transform_1(%arg0: i32, %arg1: i32, %arg2: i32, %arg3: memref<4xi32, #tpu.memory_space<smem>>) -> (i32, i32, i32) {
    %c0_i32 = arith.constant 0 : i32
    %c0_i32_0 = arith.constant 0 : i32
    return %arg0, %c0_i32, %arg1 : i32, i32, i32
  }
}

</mosaic_0001>

<llo_original>
// kernel: tpu_custom_call.1
$region0: #{tpu_custom_call.1}
  #allocation0 [shape = 'u32[]', space=smem, size = 0x4, offset = 0x4, fixed_abs, tag = 'smem constant byte address 0x4 - core index']
  #allocation1 [shape = 'u32[144,128]{1,0:T(1,128)}', space=vmem, size = 0x12000, scoped, tag = 'internal scratch']
  #allocation2 [shape = 'f32[1,1,256]{2,1,0:T(1,128)}', space=vmem, size = 0x400, scoped, tag = 'scratch operand']
  #allocation3 [shape = 's32[1]{0}', space=sflag, size = 0x4, scoped, tag = 'scoped memory for tpu_custom_call.1']
  #allocation4 [shape = 'u8[512]{0}', space=smem, size = 0x200, scoped, tag = 'prefetched SMEM operand 0']
  %s0 = inlined_call_operand.hbm [shape: s32[4], index: 0, kind: input, shape index: {}]
  %s1 = inlined_call_operand.hbm [shape: f32[4,16,256], index: 1, kind: input, shape index: {}]
  %s2 = inlined_call_operand.hbm [shape: f32[4,1,256], index: 2, kind: output, shape index: {}]
  %s3 = sld [smem:[#allocation0]]
  $region49: #{tpu_custom_call.1} parent=0
    _
  %s5 = ssub.s32 1, %s3
  %s6 = scalar_select 0, %s5, %s3
  %8 = dma.hbm_to_smem %s0, 16, [#allocation4], [#allocation3]
  %9 = dma.done [#allocation3], 16
  %10 = sfence
  $region1: #{tpu_custom_call.1} parent=0
    #allocation5 [shape = 'u8[32768]{0}', space=vmem, size = 0x8000, scoped, tag = 'input window, operand 1']
    #allocation6 [shape = 's32[2]{0}', space=sflag, size = 0x8, scoped, tag = 'scoped memory for tpu_custom_call.1']
    #allocation7 [shape = 's32[2]{0}', space=sflag, size = 0x8, scoped, tag = 'scoped memory for tpu_custom_call.1']
    #allocation8 [shape = 'u8[2048]{0}', space=vmem, size = 0x800, scoped, tag = 'output window, operand 0']
    %11 = vsyncpa [#allocation6], 0
    %s12 = scalar_lea.sflag [#allocation6], 1
    %13 = vsyncpa %s12, 0
    %14 = vsyncpa [#allocation7], 0
    %s15 = scalar_lea.sflag [#allocation7], 1
    %16 = vsyncpa %s15, 0
    loop: start=0, step=1, limit=6
    $region2: #{tpu_custom_call.1} parent=1 // loop_pre_header
      _
    $region3: #{tpu_custom_call.1} parent=1 // loop_header
      %s18 = sphi 0, %s22
      %p19 = scmp.ge.s32.totalorder %s18, 6
      %s25 = sphi 0, %s44
      %s26 = sphi 0, %s40
      %s27 = sphi 0, %s36
      %s28 = sphi 0, %s25
      %s29 = sphi 0, %s26
      %s30 = sphi 0, %s27
      %s31 = sphi 0, %s28
      %s32 = sphi 0, %s29
      %s33 = sphi 0, %s30
      %s51 = sphi 0, %s53
      %s54 = sphi 0, %s51
      %s55 = sphi 0, %s54
      %s71 = sphi 0, %s55
      %s79 = sphi 0, %s81
      %s82 = sphi 0, %s79
      %s83 = sphi 0, %s82
      %s99 = sphi 0, %s83
    $region4: #{tpu_custom_call.1} parent=1 // loop_header_branch
      %21 = sbr.rel (%p19) target = $region8
    $region5: #{tpu_custom_call.1} parent=1 // loop_body
      %s23 = ssub.s32 %s18, 1
      %s24 = ssub.s32 %s18, 2
      %s34 = sadd.s32 1, %s27
      %p35 = scmp.ge.s32.totalorder %s34, 1
      %s36 = scalar_select %p35, 0, %s34
      %s37 = sadd.s32 1, %s26
      %s38 = scalar_select %p35, %s37, %s26
      %p39 = scmp.ge.s32.totalorder %s38, 1
      %s40 = scalar_select %p39, 0, %s38
      %s41 = sadd.s32 1, %s25
      %s42 = scalar_select %p39, %s41, %s25
      %p43 = scmp.ge.s32.totalorder %s42, 4
      %s44 = scalar_select %p43, 0, %s42
      %s45 = ssub.s32 %s25, %s44
      %s46 = ssub.s32 %s27, %s36
      %s47 = sor.u32 %s45, %s46
      %s48 = ssub.s32 %s26, %s40
      %s49 = sor.u32 %s47, %s48
      %p50 = scmp.eq.s32.totalorder %s49, 0
      %s52 = sadd.s32 %s51, 1
      %s53 = scalar_select %p50, %s51, %s52
      %p56 = pneg %p50
      %p57 = scmp.eq.s32.totalorder %s18, 3
      %p58 = por %p56, %p57
      %p59 = scmp.ne.s32.totalorder %s51, %s54
      %p60 = scmp.eq.s32.totalorder %s18, 0
      %p61 = por %p59, %p60
      %p62 = scmp.ne.s32.totalorder %s51, %s54
      %p63 = scmp.eq.s32.totalorder %s23, 3
      %p64 = por %p62, %p63
      %p65 = scmp.ne.s32.totalorder %s54, %s55
      %p66 = scmp.eq.s32.totalorder %s23, 0
      %p67 = por %p65, %p66
      %p68 = scmp.ne.s32.totalorder %s54, %s55
      %p69 = scmp.eq.s32.totalorder %s24, 3
      %p70 = por %p68, %p69
      %p72 = scmp.ne.s32.totalorder %s55, %s71
      %p73 = scmp.eq.s32.totalorder %s24, 0
      %p74 = por %p72, %p73
      %s75 = ssub.s32 %s25, %s44
      %s76 = ssub.s32 %s26, %s40
      %s77 = sor.u32 %s75, %s76
      %p78 = scmp.eq.s32.totalorder %s77, 0
      %s80 = sadd.s32 %s79, 1
      %s81 = scalar_select %p78, %s79, %s80
      %p84 = pneg %p78
      %p85 = scmp.eq.s32.totalorder %s18, 3
      %p86 = por %p84, %p85
      %p87 = scmp.ne.s32.totalorder %s79, %s82
      %p88 = scmp.eq.s32.totalorder %s18, 0
      %p89 = por %p87, %p88
      %p90 = scmp.ne.s32.totalorder %s79, %s82
      %p91 = scmp.eq.s32.totalorder %s23, 3
      %p92 = por %p90, %p91
      %p93 = scmp.ne.s32.totalorder %s82, %s83
      %p94 = scmp.eq.s32.totalorder %s23, 0
      %p95 = por %p93, %p94
      %p96 = scmp.ne.s32.totalorder %s82, %s83
      %p97 = scmp.eq.s32.totalorder %s24, 3
      %p98 = por %p96, %p97
      %p100 = scmp.ne.s32.totalorder %s83, %s99
      %p101 = scmp.eq.s32.totalorder %s24, 0
      %p102 = por %p100, %p101
      %p103 = scmp.le.s32.totalorder 1, %s18
      %p104 = scmp.lt.s32.totalorder %s18, 5
      %p105 = pnand %p103, %p104
      %p106 = pneg %p105
      // Predicated region
      $region9: #{tpu_custom_call.1} parent=5 // pred_check
        _
      $region10: #{tpu_custom_call.1} parent=5 // pred_check_branch
        %108 = sbr.rel (%p105) target = $region12
      $region11: #{tpu_custom_call.1} parent=5 // pred_region
        %s109 = ssub.s32 %s18, 1
      $region12: #{tpu_custom_call.1} parent=5 // pred_fallthru
        _
      %p110 = scmp.lt.s32.totalorder %s18, 4
      // Predicated region
      $region13: #{tpu_custom_call.1} parent=5 // pred_check
        %p111 = pneg %p110
      $region14: #{tpu_custom_call.1} parent=5 // pred_check_branch
        %113 = sbr.rel (%p111) target = $region16
      $region15: #{tpu_custom_call.1} parent=5 // pred_region
        // Predicated region
        $region17: #{tpu_custom_call.1} parent=15 // pred_check
          %p114 = pneg %p61
        $region18: #{tpu_custom_call.1} parent=15 // pred_check_branch
          %116 = sbr.rel (%p114) target = $region20
        $region19: #{tpu_custom_call.1} parent=15 // pred_region
          %s117 = sand.u32 %s51, 1
          %s118 = scalar_lea.sflag [#allocation6], %s117
          %s119 = sand.u32 %s51, 1
          %s120 = smul.addr %s119, 32
          %s121 = scalar_lea.vmem [#allocation5], %s120
          %s122 = smul.u32 2, %s27
          %s123 = smul.u32 2, %s26
          %s125 = ssub.s32 512, 512
          %126 = vsyncadd %s118, %s125
          %s127 = smul.addr %s122, 2
          %s128 = sadd.s32 %s123, %s127
          %s129 = smul.addr %s25, 4
          %s130 = sadd.s32 %s128, %s129
          %s131 = smul.addr %s130, 128
          %s132 = scalar_lea.hbm %s1, %s131
          %s133 = sshll.u32 %s121, 4
          %s134 = int_to_ptr.vmem [resolvable:$true] %s133
          %139 = dma.hbm_to_vmem [thread:$0]  %s132, 512, %s134, %s118, 256, 256, 16
        $region20: #{tpu_custom_call.1} parent=15 // pred_fallthru
          _
      $region16: #{tpu_custom_call.1} parent=5 // pred_fallthru
        _
      %p140 = scmp.le.s32.totalorder 1, %s18
      %p141 = scmp.lt.s32.totalorder %s18, 5
      %p142 = pnand %p140, %p141
      %p143 = pneg %p142
      // Predicated region
      $region21: #{tpu_custom_call.1} parent=5 // pred_check
        _
      $region22: #{tpu_custom_call.1} parent=5 // pred_check_branch
        %145 = sbr.rel (%p142) target = $region24
      $region23: #{tpu_custom_call.1} parent=5 // pred_region
        %s146 = ssub.s32 %s18, 1
        %s147 = sand.u32 %s54, 1
        %s148 = scalar_lea.sflag [#allocation6], %s147
        %s149 = sand.u32 %s54, 1
        %s150 = smul.addr %s149, 32
        %s151 = scalar_lea.vmem [#allocation5], %s150
        // Predicated region
        $region25: #{tpu_custom_call.1} parent=23 // pred_check
          %p152 = pneg %p67
        $region26: #{tpu_custom_call.1} parent=23 // pred_check_branch
          %154 = sbr.rel (%p152) target = $region28
        $region27: #{tpu_custom_call.1} parent=23 // pred_region
          %155 = dma.done %s148, 512
        $region28: #{tpu_custom_call.1} parent=23 // pred_fallthru
          _
        %s156 = sand.u32 %s54, 1
        %s157 = scalar_lea.sflag [#allocation6], %s156
        %s158 = sand.u32 %s54, 1
        %s159 = smul.addr %s158, 32
        %s160 = scalar_lea.vmem [#allocation5], %s159
        %p161 = pneg %p67
        %p162 = pneg %p64
        %p163 = pneg %p95
        %p164 = pneg %p92
        %s165 = sand.u32 %s82, 1
        %s166 = scalar_lea.sflag [#allocation7], %s165
        %s167 = sand.u32 %s82, 1
        %s168 = smul.addr %s167, 2
        %s169 = scalar_lea.vmem [#allocation8], %s168
        %s170 = smul.u32 2, %s30
        %s171 = smul.u32 2, %s29
        %s172 = smul.u32 2, %s29
        %p173 = scmp.eq.s32.totalorder %s30, 0
        // Predicated region
        $region29: #{tpu_custom_call.1} parent=23 // pred_check
          %p174 = pneg %p173
        $region30: #{tpu_custom_call.1} parent=23 // pred_check_branch
          %176 = sbr.rel (%p174) target = $region32
        $region31: #{tpu_custom_call.1} parent=23 // pred_region
          %v177 = vlaneseq
          %vm178 = vcmp.ge.s32.totalorder %v177, 0
          %vm179 = vcmp.lt.s32.totalorder %v177, 256
          %vm180 = vmand %vm178, %vm179
          %181 = vst.msk [vmem:[#allocation2] sm:$0x3] %vm180, 0.0
        $region32: #{tpu_custom_call.1} parent=23 // pred_fallthru
          _
        %v182 = vld [vmem:[%s151] sm:$0xff]
        %v183 = vld [vmem:[%s151 + $0x8] sm:$0xff]
        %v184 = vld [vmem:[%s151 + $0x10] sm:$0xff]
        %v185 = vld [vmem:[%s151 + $0x18] sm:$0xff]
        %v186 = vlaneseq
        %v187 = vshrl.u32 %v186, 7
        %v188 = vadd.s32 %v187, 8
        %s189 = smul.u32 %s30, 16
        %v190 = vstv %s189
        %v191 = vadd.s32 %v187, %v190
        %v192 = vadd.s32 %v188, %v190
        %s193 = sld [smem:[#allocation4 + %s28]]
        %v194 = vstv %s193
        %vm195 = vcmp.lt.s32.totalorder %v191, %v194
        %vm196 = vcmp.lt.s32.totalorder %v192, %v194
        %v197 = vmax.f32 %v182, 0.0
        %v198 = vmax.f32 %v183, 0.0
        %v199 = vmax.f32 %v184, 0.0
        %v200 = vmax.f32 %v185, 0.0
        %v201 = vsel %vm195, %v197, 0.0
        %v202 = vsel %vm195, %v198, 0.0
        %v203 = vsel %vm196, %v199, 0.0
        %v204 = vsel %vm196, %v200, 0.0
        %v205 = vmax.f32 %v201, %v203
        %v206 = vrot.slane %v205, 4
        %v207 = vmax.f32 %v205, %v206
        %v208 = vrot.slane %v207, 2
        %v209 = vmax.f32 %v207, %v208
        %v210 = vrot.slane %v209, 1
        %v211 = vmax.f32 %v209, %v210
        %v212 = vmax.f32 %v202, %v204
        %v213 = vrot.slane %v212, 4
        %v214 = vmax.f32 %v212, %v213
        %v215 = vrot.slane %v214, 2
        %v216 = vmax.f32 %v214, %v215
        %v217 = vrot.slane %v216, 1
        %v218 = vmax.f32 %v216, %v217
        %v219 = vld [vmem:[#allocation2] sm:$0x3]
        %v222 = vcombine.low %v211, %v218
        %v224 = vunpack.c.l.s4 1966171168
        %v225 = vunpack.c.0.s8 %v224
        %v226 = vlaneseq
        %v227 = vshrl.u32 %v226, 7
        %v228 = vsub.s32 %v225, %v227
        %v229 = vrot.slane %v222, %v228
        %v231 = vunpack.c.l.s4 1966171168
        %v232 = vunpack.c.0.s8 %v231
        %v233 = vlaneseq
        %v234 = vshrl.u32 %v233, 7
        %v235 = vsub.s32 %v232, %v234
        %v236 = vrot.slane %v229, %v235
        %v238 = vmax.f32 %v219, %v236
        %v239 = vlaneseq
        %vm240 = vcmp.ge.s32.totalorder %v239, 0
        %vm241 = vcmp.lt.s32.totalorder %v239, 256
        %vm242 = vmand %vm240, %vm241
        %243 = vst.msk [vmem:[#allocation2] sm:$0x3] %vm242, %v238
        // Predicated region
        $region33: #{tpu_custom_call.1} parent=23 // pred_check
          %p244 = pneg %p173
        $region34: #{tpu_custom_call.1} parent=23 // pred_check_branch
          %246 = sbr.rel (%p244) target = $region36
        $region35: #{tpu_custom_call.1} parent=23 // pred_region
          %v247 = vld [vmem:[#allocation2] sm:$0x3]
          %v248 = vadd.f32 %v247, 1.0
          %v249 = vlog2.pop %v248
          %v250 = vmul.f32 %v249, 0.6931472
          %v251 = vmul.f32 -0.5, %v247
          %v252 = vadd.f32 %v251, 1.0
          %v253 = vmul.f32 %v252, %v247
          %v254 = vand.u32 2147483647, %v247
          %vm255 = vcmp.lt.f32.partialorder %v254, 0.0004427343
          %v256 = vsel %vm255, %v253, %v250
          %257 = vst.msk [vmem:[%s169] sm:$0x3] %vm242, %v256
        $region36: #{tpu_custom_call.1} parent=23 // pred_fallthru
          _
        %s258 = sand.u32 %s82, 1
        %s259 = scalar_lea.sflag [#allocation7], %s258
        %s260 = sand.u32 %s82, 1
        %s261 = smul.addr %s260, 2
        %s262 = scalar_lea.vmem [#allocation8], %s261
        // Predicated region
        $region37: #{tpu_custom_call.1} parent=23 // pred_check
          %p263 = pneg %p92
        $region38: #{tpu_custom_call.1} parent=23 // pred_check_branch
          %265 = sbr.rel (%p263) target = $region40
        $region39: #{tpu_custom_call.1} parent=23 // pred_region
          %s266 = smul.u32 2, %s29
          %s268 = ssub.s32 32, 32
          %269 = vsyncadd %s259, %s268
          %s270 = smul.addr %s28, 2
          %s271 = sadd.s32 %s266, %s270
          %s272 = smul.addr %s271, 16
          %s273 = scalar_lea.hbm %s2, %s272
          %s275 = sshll.u32 %s262, 4
          %s276 = int_to_ptr.vmem [resolvable:$true] %s275
          %278 = dma.vmem_to_hbm [thread:$0]  %s276, 32, %s273, %s259
        $region40: #{tpu_custom_call.1} parent=23 // pred_fallthru
          _
      $region24: #{tpu_custom_call.1} parent=5 // pred_fallthru
        _
      %p279 = scmp.le.s32.totalorder 2, %s18
      // Predicated region
      $region41: #{tpu_custom_call.1} parent=5 // pred_check
        %p280 = pneg %p279
      $region42: #{tpu_custom_call.1} parent=5 // pred_check_branch
        %282 = sbr.rel (%p280) target = $region44
      $region43: #{tpu_custom_call.1} parent=5 // pred_region
        %s283 = ssub.s32 %s18, 2
        // Predicated region
        $region45: #{tpu_custom_call.1} parent=43 // pred_check
          %p284 = pneg %p98
        $region46: #{tpu_custom_call.1} parent=43 // pred_check_branch
          %286 = sbr.rel (%p284) target = $region48
        $region47: #{tpu_custom_call.1} parent=43 // pred_region
          %s287 = sand.u32 %s83, 1
          %s288 = scalar_lea.sflag [#allocation7], %s287
          %s289 = sand.u32 %s83, 1
          %s290 = smul.addr %s289, 2
          %s291 = scalar_lea.vmem [#allocation8], %s290
          %292 = dma.done %s288, 32
        $region48: #{tpu_custom_call.1} parent=43 // pred_fallthru
          _
      $region44: #{tpu_custom_call.1} parent=5 // pred_fallthru
        _
    $region6: #{tpu_custom_call.1} parent=1 // loop_footer
      %s22 = sadd.s32 1, %s18
    $region7: #{tpu_custom_call.1} parent=1 // loop_footer_branch
      %17 = sbr.rel target = $region3
    $region8: #{tpu_custom_call.1} parent=1 // loop_exit
      _
    %293 = vsyncpa [#allocation6], 1
    %s294 = scalar_lea.sflag [#allocation6], 1
    %295 = vsyncpa %s294, 1
    %296 = vsyncpa [#allocation7], 1
    %s297 = scalar_lea.sflag [#allocation7], 1
    %298 = vsyncpa %s297, 1

</llo_original>
